<compile_context>
chip_gen: v6e
topology: v6e:2x2x1
jax: 0.10.0
libtpu: 0.0.40
codegen_flags: <defaults>
</compile_context>

<pallas_src>
import functools

import jax
import jax.numpy as jnp
from jax.experimental import pallas as pl
from jax.experimental.pallas import tpu as pltpu


def _orthogonal(key, rows, cols, gain=1.0, dtype=jnp.float32):
    """Deterministic orthogonal init matching nn.init.orthogonal_ semantics."""
    big, small = max(rows, cols), min(rows, cols)
    a = jax.random.normal(key, (big, small), dtype=jnp.float32)
    q, r = jnp.linalg.qr(a)
    q = q * jnp.sign(jnp.diag(r))[None, :]  # sign fix for a unique decomposition
    if rows < cols:
        q = q.T
    return (gain * q[:rows, :cols]).astype(dtype)


def _round_up(x, m):
    return ((x + m - 1) // m) * m


def _pick_block_b(B):
    """One grid step for small batches; otherwise the largest <=512 divisor
    (256-aligned preferred for the 256x256 MXU, keeping >=2 steps for v7x)."""
    if B <= 512:
        return B
    for cand in (512, 256, 384, 128, 64, 32, 16, 8):
        if B % cand == 0:
            return cand
    return B


def _vmem_budget_bytes(block_b, d_in, h1, h2, d_out_p):
    bf16, f32 = 2, 4
    x_tile = block_b * d_in * bf16
    o_tile = block_b * d_out_p * f32
    weights = (d_in * h1 + h1 * h2 + h2 * d_out_p) * bf16
    biases = (h1 + h2 + d_out_p) * f32
    # default pipelining double-buffers every operand
    need = 2 * (x_tile + o_tile + weights + biases)
    # headroom for f32 intermediate activations / bf16 recasts
    need += 3 * block_b * max(h1, h2) * f32
    # clamp: at least 16 MiB scoped, never above ~56 MiB (v7x VMEM is 64 MiB)
    return int(min(max(2 * need, 16 * 2**20), 56 * 2**20))


def mlp_kernel(x_ref, w1_ref, b1_ref, w2_ref, b2_ref, w3_ref, b3_ref, o_ref):
    # Layer 1: bf16 matmul on the MXU, f32 accumulation; bias + ReLU in f32.
    h = jnp.dot(x_ref[...], w1_ref[...], preferred_element_type=jnp.float32)
    h = jnp.maximum(h + b1_ref[...], 0.0)
    # Layer 2.
    h = jnp.dot(h.astype(w2_ref.dtype), w2_ref[...],
                preferred_element_type=jnp.float32)
    h = jnp.maximum(h + b2_ref[...], 0.0)
    # Output layer (no activation); padded to a lane-dense width.
    y = jnp.dot(h.astype(w3_ref.dtype), w3_ref[...],
                preferred_element_type=jnp.float32)
    o_ref[...] = (y + b3_ref[...]).astype(o_ref.dtype)


@functools.partial(jax.jit, static_argnames=("block_b",))
def simple_mlp_forward(x, params, block_b=None):
    (w1t, b1), (w2t, b2), (w3t, b3) = params
    B, D_in = x.shape
    H1 = w1t.shape[1]
    H2 = w2t.shape[1]
    D_out = w3t.shape[1]

    if block_b is None:
        block_b = _pick_block_b(B)
    assert B % block_b == 0
    grid = (B // block_b,)

    # Lane-dense output: pad the last layer to a multiple of 128 columns so the
    # output store is a full-lane (unmasked) vst; slice back outside the kernel.
    D_out_p = max(128, _round_up(D_out, 128))
    w3t_p = jnp.pad(w3t, ((0, 0), (0, D_out_p - D_out)))
    b3_p = jnp.pad(b3, ((0, 0), (0, D_out_p - D_out)))

    # bf16 storage for MXU operands (accumulation stays f32 inside the kernel).
    x_bf = x.astype(jnp.bfloat16)
    w1_bf = w1t.astype(jnp.bfloat16)
    w2_bf = w2t.astype(jnp.bfloat16)
    w3_bf = w3t_p.astype(jnp.bfloat16)

    flops = 2 * B * (D_in * H1 + H1 * H2 + H2 * D_out_p)
    bytes_accessed = (
        B * D_in * 2                                   # x (bf16)
        + (D_in * H1 + H1 * H2 + H2 * D_out_p) * 2     # weights (bf16)
        + (H1 + H2 + D_out_p) * 4                      # biases (f32)
        + B * D_out_p * 4                              # output (f32)
    )

    def replicate(shape):
        # Constant index_map: weights/biases stay resident across grid steps.
        return pl.BlockSpec(shape, lambda i: (0, 0))

    out = pl.pallas_call(
        mlp_kernel,
        out_shape=jax.ShapeDtypeStruct((B, D_out_p), x.dtype),
        grid_spec=pltpu.PrefetchScalarGridSpec(
            num_scalar_prefetch=0,
            grid=grid,
            in_specs=[
                pl.BlockSpec((block_b, D_in), lambda i: (i, 0)),  # x tile
                replicate((D_in, H1)),     # w1^T (bf16)
                replicate((1, H1)),        # b1   (f32)
                replicate((H1, H2)),       # w2^T (bf16)
                replicate((1, H2)),        # b2   (f32)
                replicate((H2, D_out_p)),  # w3^T (bf16, padded)
                replicate((1, D_out_p)),   # b3   (f32, padded)
            ],
            out_specs=pl.BlockSpec((block_b, D_out_p), lambda i: (i, 0)),
        ),
        compiler_params=pltpu.CompilerParams(
            dimension_semantics=("parallel",),
            vmem_limit_bytes=_vmem_budget_bytes(block_b, D_in, H1, H2, D_out_p),
        ),
        cost_estimate=pl.CostEstimate(
            flops=flops, transcendentals=0, bytes_accessed=bytes_accessed),
    )(x_bf, w1_bf, b1, w2_bf, b2, w3_bf, b3_p)

    return out[:, :D_out]


def init_simple_mlp_params(key, input_dim, output_dim, hidden_sizes):
    """orthogonal_weight_init: orthogonal weights (gain=1), zero biases."""
    dims = [input_dim] + list(hidden_sizes) + [output_dim]
    params = []
    keys = jax.random.split(key, len(dims) - 1)
    for k, d_in, d_out in zip(keys, dims[:-1], dims[1:]):
        # torch Linear weight is (out, in); store its transpose (in, out).
        w = _orthogonal(k, d_out, d_in)            # (out, in), orthogonal
        w_t = jnp.asarray(w.T, dtype=jnp.float32)  # (in, out)
        b = jnp.zeros((1, d_out), dtype=jnp.float32)
        params.append((w_t, b))
    return params


def reference_mlp_bf16(x, params):
    """Reference with the same bf16 operand quantization the kernel uses
    (f32 accumulation), so only summation-order rounding differs."""
    def q(a):
        return a.astype(jnp.bfloat16).astype(jnp.float32)
    (w1t, b1), (w2t, b2), (w3t, b3) = params
    h = jnp.maximum(q(x) @ q(w1t) + b1, 0.0)
    h = jnp.maximum(q(h) @ q(w2t) + b2, 0.0)
    return q(h) @ q(w3t) + b3


if __name__ == "__main__":
    key = jax.random.PRNGKey(0)
    k_x, k_p = jax.random.split(key)

    # Small shapes consistent with SimpleMLP(input_dim, output_dim, hidden_sizes)
    batch, input_dim, output_dim = 16, 64, 32
    hidden_sizes = [128, 128]

    x = jax.random.normal(k_x, (batch, input_dim), dtype=jnp.float32)
    params = init_simple_mlp_params(k_p, input_dim, output_dim, hidden_sizes)

    out = simple_mlp_forward(x, params)   # block_b auto -> whole batch, grid=(1,)
    out = jax.block_until_ready(out)

    ref = reference_mlp_bf16(x, params)
    assert out.shape == (batch, output_dim)
    assert jnp.allclose(out, ref, atol=2e-3, rtol=2e-3), "mismatch vs reference"

    print("KERNEL_OK")
</pallas_src>

<mosaic_0001>
module attributes {stable_mosaic.version = 11 : i64} {
  func.func @mlp_kernel(%arg0: i32, %arg1: memref<16x64xbf16, #tpu.memory_space<vmem>>, %arg2: memref<64x128xbf16, #tpu.memory_space<vmem>>, %arg3: memref<1x128xf32, #tpu.memory_space<vmem>>, %arg4: memref<128x128xbf16, #tpu.memory_space<vmem>>, %arg5: memref<1x128xf32, #tpu.memory_space<vmem>>, %arg6: memref<128x128xbf16, #tpu.memory_space<vmem>>, %arg7: memref<1x128xf32, #tpu.memory_space<vmem>>, %arg8: memref<16x128xf32, #tpu.memory_space<vmem>>) attributes {dimension_semantics = [#tpu.dimension_semantics<parallel>], iteration_bounds = array<i64: 1>, scalar_prefetch = 0 : i64, scratch_operands = 0 : i64, tpu.core_type = #tpu.core_type<tc>, window_params = [{transform_indices = @transform_0, window_bounds = array<i64: 16, 64>}, {pipeline_mode = #tpu.pipeline_mode<synchronous>, transform_indices = @transform_1, window_bounds = array<i64: 64, 128>}, {pipeline_mode = #tpu.pipeline_mode<synchronous>, transform_indices = @transform_2, window_bounds = array<i64: 1, 128>}, {pipeline_mode = #tpu.pipeline_mode<synchronous>, transform_indices = @transform_3, window_bounds = array<i64: 128, 128>}, {pipeline_mode = #tpu.pipeline_mode<synchronous>, transform_indices = @transform_4, window_bounds = array<i64: 1, 128>}, {pipeline_mode = #tpu.pipeline_mode<synchronous>, transform_indices = @transform_5, window_bounds = array<i64: 128, 128>}, {pipeline_mode = #tpu.pipeline_mode<synchronous>, transform_indices = @transform_6, window_bounds = array<i64: 1, 128>}, {transform_indices = @transform_7, window_bounds = array<i64: 16, 128>}]} {
    %c0 = arith.constant 0 : index
    %c0_0 = arith.constant 0 : index
    %0 = vector.load %arg1[%c0, %c0_0] : memref<16x64xbf16, #tpu.memory_space<vmem>>, vector<16x64xbf16>
    %c0_1 = arith.constant 0 : index
    %c0_2 = arith.constant 0 : index
    %1 = vector.load %arg2[%c0_1, %c0_2] : memref<64x128xbf16, #tpu.memory_space<vmem>>, vector<64x128xbf16>
    %cst = arith.constant dense<0.000000e+00> : vector<16x128xf32>
    %2 = tpu.matmul %0, %1, %cst {dimension_numbers = #tpu.dot_dimension_numbers<[1], [0], [0], [1], [0, 0, 1, 1], [], []>} : vector<16x64xbf16>, vector<64x128xbf16>, vector<16x128xf32> -> vector<16x128xf32>
    %c0_3 = arith.constant 0 : index
    %c0_4 = arith.constant 0 : index
    %3 = vector.load %arg3[%c0_3, %c0_4] : memref<1x128xf32, #tpu.memory_space<vmem>>, vector<1x128xf32>
    %4 = vector.broadcast %3 : vector<1x128xf32> to vector<16x128xf32>
    %5 = arith.addf %2, %4 : vector<16x128xf32>
    %cst_5 = arith.constant 0.000000e+00 : f32
    %6 = vector.broadcast %cst_5 : f32 to vector<16x128xf32>
    %7 = arith.maximumf %5, %6 : vector<16x128xf32>
    %8 = arith.truncf %7 : vector<16x128xf32> to vector<16x128xbf16>
    %c0_6 = arith.constant 0 : index
    %c0_7 = arith.constant 0 : index
    %9 = vector.load %arg4[%c0_6, %c0_7] : memref<128x128xbf16, #tpu.memory_space<vmem>>, vector<128x128xbf16>
    %cst_8 = arith.constant dense<0.000000e+00> : vector<16x128xf32>
    %10 = tpu.matmul %8, %9, %cst_8 {dimension_numbers = #tpu.dot_dimension_numbers<[1], [0], [0], [1], [0, 0, 1, 1], [], []>} : vector<16x128xbf16>, vector<128x128xbf16>, vector<16x128xf32> -> vector<16x128xf32>
    %c0_9 = arith.constant 0 : index
    %c0_10 = arith.constant 0 : index
    %11 = vector.load %arg5[%c0_9, %c0_10] : memref<1x128xf32, #tpu.memory_space<vmem>>, vector<1x128xf32>
    %12 = vector.broadcast %11 : vector<1x128xf32> to vector<16x128xf32>
    %13 = arith.addf %10, %12 : vector<16x128xf32>
    %cst_11 = arith.constant 0.000000e+00 : f32
    %14 = vector.broadcast %cst_11 : f32 to vector<16x128xf32>
    %15 = arith.maximumf %13, %14 : vector<16x128xf32>
    %16 = arith.truncf %15 : vector<16x128xf32> to vector<16x128xbf16>
    %c0_12 = arith.constant 0 : index
    %c0_13 = arith.constant 0 : index
    %17 = vector.load %arg6[%c0_12, %c0_13] : memref<128x128xbf16, #tpu.memory_space<vmem>>, vector<128x128xbf16>
    %cst_14 = arith.constant dense<0.000000e+00> : vector<16x128xf32>
    %18 = tpu.matmul %16, %17, %cst_14 {dimension_numbers = #tpu.dot_dimension_numbers<[1], [0], [0], [1], [0, 0, 1, 1], [], []>} : vector<16x128xbf16>, vector<128x128xbf16>, vector<16x128xf32> -> vector<16x128xf32>
    %c0_15 = arith.constant 0 : index
    %c0_16 = arith.constant 0 : index
    %19 = vector.load %arg7[%c0_15, %c0_16] : memref<1x128xf32, #tpu.memory_space<vmem>>, vector<1x128xf32>
    %20 = vector.broadcast %19 : vector<1x128xf32> to vector<16x128xf32>
    %21 = arith.addf %18, %20 : vector<16x128xf32>
    %c0_17 = arith.constant 0 : index
    %c0_18 = arith.constant 0 : index
    %22 = vector.load %arg8[%c0_17, %c0_18] : memref<16x128xf32, #tpu.memory_space<vmem>>, vector<16x128xf32>
    tpu.vector_store %arg8[%c0_17, %c0_18], %21 {strides = array<i32>} : memref<16x128xf32, #tpu.memory_space<vmem>>, vector<16x128xf32>,
    return
  }
  func.func @transform_0(%arg0: i32) -> (i32, i32) {
    %c0_i32 = arith.constant 0 : i32
    %c0_i32_0 = arith.constant 0 : i32
    return %arg0, %c0_i32 : i32, i32
  }
  func.func @transform_1(%arg0: i32) -> (i32, i32) {
    %c0_i32 = arith.constant 0 : i32
    %c0_i32_0 = arith.constant 0 : i32
    %c0_i32_1 = arith.constant 0 : i32
    return %c0_i32, %c0_i32_0 : i32, i32
  }
  func.func @transform_2(%arg0: i32) -> (i32, i32) {
    %c0_i32 = arith.constant 0 : i32
    %c0_i32_0 = arith.constant 0 : i32
    %c0_i32_1 = arith.constant 0 : i32
    return %c0_i32, %c0_i32_0 : i32, i32
  }
  func.func @transform_3(%arg0: i32) -> (i32, i32) {
    %c0_i32 = arith.constant 0 : i32
    %c0_i32_0 = arith.constant 0 : i32
    %c0_i32_1 = arith.constant 0 : i32
    return %c0_i32, %c0_i32_0 : i32, i32
  }
  func.func @transform_4(%arg0: i32) -> (i32, i32) {
    %c0_i32 = arith.constant 0 : i32
    %c0_i32_0 = arith.constant 0 : i32
    %c0_i32_1 = arith.constant 0 : i32
    return %c0_i32, %c0_i32_0 : i32, i32
  }
  func.func @transform_5(%arg0: i32) -> (i32, i32) {
    %c0_i32 = arith.constant 0 : i32
    %c0_i32_0 = arith.constant 0 : i32
    %c0_i32_1 = arith.constant 0 : i32
    return %c0_i32, %c0_i32_0 : i32, i32
  }
  func.func @transform_6(%arg0: i32) -> (i32, i32) {
    %c0_i32 = arith.constant 0 : i32
    %c0_i32_0 = arith.constant 0 : i32
    %c0_i32_1 = arith.constant 0 : i32
    return %c0_i32, %c0_i32_0 : i32, i32
  }
  func.func @transform_7(%arg0: i32) -> (i32, i32) {
    %c0_i32 = arith.constant 0 : i32
    %c0_i32_0 = arith.constant 0 : i32
    return %arg0, %c0_i32 : i32, i32
  }
}

</mosaic_0001>

<llo_original>
// kernel: simple_mlp_forward.1
$region0: #{simple_mlp_forward.1}
  #allocation0 [shape = 'u32[]', space=smem, size = 0x4, offset = 0x4, fixed_abs, tag = 'smem constant byte address 0x4 - core index']
  #allocation1 [shape = 'u32[144,128]{1,0:T(1,128)}', space=vmem, size = 0x12000, scoped, tag = 'internal scratch']
  %s0 = inlined_call_operand.vmem [shape: bf16[16,64], index: 0, kind: input, shape index: {}]
  %s1 = inlined_call_operand.vmem [shape: bf16[64,128], index: 1, kind: input, shape index: {}]
  %s2 = inlined_call_operand.vmem [shape: f32[1,128], index: 2, kind: input, shape index: {}]
  %s3 = inlined_call_operand.vmem [shape: bf16[128,128], index: 3, kind: input, shape index: {}]
  %s4 = inlined_call_operand.vmem [shape: f32[1,128], index: 4, kind: input, shape index: {}]
  %s5 = inlined_call_operand.vmem [shape: bf16[128,128], index: 5, kind: input, shape index: {}]
  %s6 = inlined_call_operand.vmem [shape: f32[1,128], index: 6, kind: input, shape index: {}]
  %s7 = inlined_call_operand.hbm [shape: f32[16,128], index: 7, kind: output, shape index: {}]
  %s8 = sld [smem:[#allocation0]]
  $region38: #{simple_mlp_forward.1} parent=0
    _
  %s10 = ssub.s32 1, %s8
  %s11 = scalar_select 0, %s10, %s8
  $region1: #{simple_mlp_forward.1} parent=0
    #allocation2 [shape = 'u8[8192]{0}', space=vmem, size = 0x2000, scoped, tag = 'output window, operand 0, single buffered']
    #allocation3 [shape = 's32[1]{0}', space=sflag, size = 0x4, scoped, tag = 'scoped memory for simple_mlp_forward.1']
    %12 = vsyncpa [#allocation3], 0
    // Predicated region
    $region2: #{simple_mlp_forward.1} parent=1 // pred_check
      _
    $region3: #{simple_mlp_forward.1} parent=1 // pred_check_branch
      %14 = sbr.rel (0) target = $region5
    $region4: #{simple_mlp_forward.1} parent=1 // pred_region
      _
    $region5: #{simple_mlp_forward.1} parent=1 // pred_fallthru
      _
    // Predicated region
    $region6: #{simple_mlp_forward.1} parent=1 // pred_check
      _
    $region7: #{simple_mlp_forward.1} parent=1 // pred_check_branch
      %16 = sbr.rel (0) target = $region9
    $region8: #{simple_mlp_forward.1} parent=1 // pred_region
      _
    $region9: #{simple_mlp_forward.1} parent=1 // pred_fallthru
      _
    // Predicated region
    $region10: #{simple_mlp_forward.1} parent=1 // pred_check
      _
    $region11: #{simple_mlp_forward.1} parent=1 // pred_check_branch
      %18 = sbr.rel (0) target = $region13
    $region12: #{simple_mlp_forward.1} parent=1 // pred_region
      _
    $region13: #{simple_mlp_forward.1} parent=1 // pred_fallthru
      _
    // Predicated region
    $region14: #{simple_mlp_forward.1} parent=1 // pred_check
      _
    $region15: #{simple_mlp_forward.1} parent=1 // pred_check_branch
      %20 = sbr.rel (0) target = $region17
    $region16: #{simple_mlp_forward.1} parent=1 // pred_region
      _
    $region17: #{simple_mlp_forward.1} parent=1 // pred_fallthru
      _
    // Predicated region
    $region18: #{simple_mlp_forward.1} parent=1 // pred_check
      _
    $region19: #{simple_mlp_forward.1} parent=1 // pred_check_branch
      %22 = sbr.rel (0) target = $region21
    $region20: #{simple_mlp_forward.1} parent=1 // pred_region
      _
    $region21: #{simple_mlp_forward.1} parent=1 // pred_fallthru
      _
    // Predicated region
    $region22: #{simple_mlp_forward.1} parent=1 // pred_check
      _
    $region23: #{simple_mlp_forward.1} parent=1 // pred_check_branch
      %24 = sbr.rel (0) target = $region25
    $region24: #{simple_mlp_forward.1} parent=1 // pred_region
      _
    $region25: #{simple_mlp_forward.1} parent=1 // pred_fallthru
      _
    // Predicated region
    $region26: #{simple_mlp_forward.1} parent=1 // pred_check
      _
    $region27: #{simple_mlp_forward.1} parent=1 // pred_check_branch
      %26 = sbr.rel (0) target = $region29
    $region28: #{simple_mlp_forward.1} parent=1 // pred_region
      _
    $region29: #{simple_mlp_forward.1} parent=1 // pred_fallthru
      _
    %v28 = vld [vmem:[%s0] sm:$0xf]
    %v29 = vld [vmem:[%s0 + $0x4] sm:$0xf]
    %v30 = vld [vmem:[%s1] sm:$0xf]
    %v31 = vld [vmem:[%s1 + $0x4] sm:$0xf]
    %v32 = vld [vmem:[%s1 + $0x8] sm:$0xf]
    %v33 = vld [vmem:[%s1 + $0xc] sm:$0xf]
    %v34 = vld [vmem:[%s1 + $0x10] sm:$0xf]
    %v35 = vld [vmem:[%s1 + $0x14] sm:$0xf]
    %v36 = vld [vmem:[%s1 + $0x18] sm:$0xf]
    %v37 = vld [vmem:[%s1 + $0x1c] sm:$0xf]
    %v38 = vld [vmem:[%s2] sm:$0x1]
    %v40 = vlaneseq
    %v41 = vshrl.u32 %v40, 7
    %v42 = vsub.s32 0, %v41
    %v43 = vrot.slane %v38, %v42
    %v47 = vunpack.c.l.b16 %v28
    %v48 = vunpack.c.l.b16 %v29
    %v49 = vpack.c.b16 %v48, %v47
    %v58 = vunpack.c.l.b16 %v30
    %v59 = vunpack.c.l.b16 %v31
    %v60 = vunpack.c.l.b16 %v32
    %v61 = vunpack.c.l.b16 %v33
    %v62 = vunpack.c.l.b16 %v34
    %v63 = vunpack.c.l.b16 %v35
    %v64 = vunpack.c.l.b16 %v36
    %v65 = vunpack.c.l.b16 %v37
    %v66 = vpack.c.b16 %v59, %v58
    %v67 = vpack.c.b16 %v61, %v60
    %v68 = vpack.c.b16 %v63, %v62
    %v69 = vpack.c.b16 %v65, %v64
    %vm74 = vcmask 523264
    %v76 = vsel %vm74, %v49, 0
    %78 = vmatprep.subr.bf16.mxu0 0
    %79 = vmatpush1.bf16.msra.mxu0 0
    %80 = vmatprep.subr.bf16.mxu0 0
    %81 = vmatpush1.bf16.msra.mxu0 0
    %82 = vmatprep.subr.bf16.mxu0 0
    %83 = vmatpush1.bf16.msra.mxu0 0
    %84 = vmatprep.subr.bf16.mxu0 0
    %85 = vmatpush1.bf16.msra.mxu0 0
    %86 = vmatprep.subr.bf16.mxu0 0
    %87 = vmatpush1.bf16.msra.mxu0 %v69
    %88 = vmatprep.subr.bf16.mxu0 0
    %89 = vmatpush1.bf16.msra.mxu0 %v68
    %90 = vmatprep.subr.bf16.mxu0 0
    %91 = vmatpush1.bf16.msra.mxu0 %v67
    %92 = vmatprep.subr.bf16.mxu0 0
    %93 = vmatpush1.bf16.msra.mxu0 %v66
    %94 = vmatprep.subr.bf16.mxu0 0
    %95 = vmatpush2.bf16.msra.mxu0 0
    %96 = vmatprep.subr.bf16.mxu0 0
    %97 = vmatpush2.bf16.msra.mxu0 0
    %98 = vmatprep.subr.bf16.mxu0 0
    %99 = vmatpush2.bf16.msra.mxu0 0
    %100 = vmatprep.subr.bf16.mxu0 0
    %101 = vmatpush2.bf16.msra.mxu0 0
    %102 = vmatprep.subr.bf16.mxu0 0
    %103 = vmatpush2.bf16.msra.mxu0 0
    %104 = vmatprep.subr.bf16.mxu0 0
    %105 = vmatpush2.bf16.msra.mxu0 0
    %106 = vmatprep.subr.bf16.mxu0 0
    %107 = vmatpush2.bf16.msra.mxu0 0
    %108 = vmatprep.subr.bf16.mxu0 0
    %109 = vmatpush2.bf16.msra.mxu0 0
    %110 = vmatprep.mubr.bf16.mxu0 0
    %111 = vmatmul.mubr.bf16.gmra.mxu0 %v76
    %v112 = vpop.f32.mrf.mxu0
    %v113 = vadd.f32 %v43, %v112
    %v114 = vpop.f32.mrf.mxu0
    %v115 = vpop.f32.mrf.mxu0
    %v116 = vadd.f32 %v43, %v115
    %v117 = vpop.f32.mrf.mxu0
    %118 = vdwg.mxu0
    %v119 = vmax.f32 %v113, 0.0
    %v120 = vmax.f32 %v116, 0.0
    %v121 = vpack.c.bf16 %v120, %v119
    %v122 = vld [vmem:[%s3] sm:$0xf]
    %v123 = vld [vmem:[%s3 + $0x4] sm:$0xf]
    %v124 = vld [vmem:[%s3 + $0x8] sm:$0xf]
    %v125 = vld [vmem:[%s3 + $0xc] sm:$0xf]
    %v126 = vld [vmem:[%s3 + $0x10] sm:$0xf]
    %v127 = vld [vmem:[%s3 + $0x14] sm:$0xf]
    %v128 = vld [vmem:[%s3 + $0x18] sm:$0xf]
    %v129 = vld [vmem:[%s3 + $0x1c] sm:$0xf]
    %v130 = vld [vmem:[%s3 + $0x20] sm:$0xf]
    %v131 = vld [vmem:[%s3 + $0x24] sm:$0xf]
    %v132 = vld [vmem:[%s3 + $0x28] sm:$0xf]
    %v133 = vld [vmem:[%s3 + $0x2c] sm:$0xf]
    %v134 = vld [vmem:[%s3 + $0x30] sm:$0xf]
    %v135 = vld [vmem:[%s3 + $0x34] sm:$0xf]
    %v136 = vld [vmem:[%s3 + $0x38] sm:$0xf]
    %v137 = vld [vmem:[%s3 + $0x3c] sm:$0xf]
    %v138 = vld [vmem:[%s4] sm:$0x1]
    %v140 = vlaneseq
    %v141 = vshrl.u32 %v140, 7
    %v142 = vsub.s32 0, %v141
    %v143 = vrot.slane %v138, %v142
    %v161 = vunpack.c.l.b16 %v122
    %v162 = vunpack.c.l.b16 %v123
    %v163 = vunpack.c.l.b16 %v124
    %v164 = vunpack.c.l.b16 %v125
    %v165 = vunpack.c.l.b16 %v126
    %v166 = vunpack.c.l.b16 %v127
    %v167 = vunpack.c.l.b16 %v128
    %v168 = vunpack.c.l.b16 %v129
    %v169 = vunpack.c.l.b16 %v130
    %v170 = vunpack.c.l.b16 %v131
    %v171 = vunpack.c.l.b16 %v132
    %v172 = vunpack.c.l.b16 %v133
    %v173 = vunpack.c.l.b16 %v134
    %v174 = vunpack.c.l.b16 %v135
    %v175 = vunpack.c.l.b16 %v136
    %v176 = vunpack.c.l.b16 %v137
    %v177 = vpack.c.b16 %v162, %v161
    %v178 = vpack.c.b16 %v164, %v163
    %v179 = vpack.c.b16 %v166, %v165
    %v180 = vpack.c.b16 %v168, %v167
    %v181 = vpack.c.b16 %v170, %v169
    %v182 = vpack.c.b16 %v172, %v171
    %v183 = vpack.c.b16 %v174, %v173
    %v184 = vpack.c.b16 %v176, %v175
    %193 = vmatprep.subr.bf16.mxu0 0
    %194 = vmatpush1.bf16.msra.mxu0 %v184
    %195 = vmatprep.subr.bf16.mxu0 0
    %196 = vmatpush1.bf16.msra.mxu0 %v183
    %197 = vmatprep.subr.bf16.mxu0 0
    %198 = vmatpush1.bf16.msra.mxu0 %v182
    %199 = vmatprep.subr.bf16.mxu0 0
    %200 = vmatpush1.bf16.msra.mxu0 %v181
    %201 = vmatprep.subr.bf16.mxu0 0
    %202 = vmatpush1.bf16.msra.mxu0 %v180
    %203 = vmatprep.subr.bf16.mxu0 0
    %204 = vmatpush1.bf16.msra.mxu0 %v179
    %205 = vmatprep.subr.bf16.mxu0 0
    %206 = vmatpush1.bf16.msra.mxu0 %v178
    %207 = vmatprep.subr.bf16.mxu0 0
    %208 = vmatpush1.bf16.msra.mxu0 %v177
    %209 = vmatprep.subr.bf16.mxu0 0
    %210 = vmatpush2.bf16.msra.mxu0 0
    %211 = vmatprep.subr.bf16.mxu0 0
    %212 = vmatpush2.bf16.msra.mxu0 0
    %213 = vmatprep.subr.bf16.mxu0 0
    %214 = vmatpush2.bf16.msra.mxu0 0
    %215 = vmatprep.subr.bf16.mxu0 0
    %216 = vmatpush2.bf16.msra.mxu0 0
    %217 = vmatprep.subr.bf16.mxu0 0
    %218 = vmatpush2.bf16.msra.mxu0 0
    %219 = vmatprep.subr.bf16.mxu0 0
    %220 = vmatpush2.bf16.msra.mxu0 0
    %221 = vmatprep.subr.bf16.mxu0 0
    %222 = vmatpush2.bf16.msra.mxu0 0
    %223 = vmatprep.subr.bf16.mxu0 0
    %224 = vmatpush2.bf16.msra.mxu0 0
    %225 = vmatprep.mubr.bf16.mxu0 0
    %226 = vmatmul.mubr.bf16.gmra.mxu0 %v121
    %v227 = vpop.f32.mrf.mxu0
    %v228 = vadd.f32 %v143, %v227
    %v229 = vpop.f32.mrf.mxu0
    %v230 = vpop.f32.mrf.mxu0
    %v231 = vadd.f32 %v143, %v230
    %v232 = vpop.f32.mrf.mxu0
    %233 = vdwg.mxu0
    %v234 = vmax.f32 %v228, 0.0
    %v235 = vmax.f32 %v231, 0.0
    %v236 = vpack.c.bf16 %v235, %v234
    %v237 = vld [vmem:[%s5] sm:$0xf]
    %v238 = vld [vmem:[%s5 + $0x4] sm:$0xf]
    %v239 = vld [vmem:[%s5 + $0x8] sm:$0xf]
    %v240 = vld [vmem:[%s5 + $0xc] sm:$0xf]
    %v241 = vld [vmem:[%s5 + $0x10] sm:$0xf]
    %v242 = vld [vmem:[%s5 + $0x14] sm:$0xf]
    %v243 = vld [vmem:[%s5 + $0x18] sm:$0xf]
    %v244 = vld [vmem:[%s5 + $0x1c] sm:$0xf]
    %v245 = vld [vmem:[%s5 + $0x20] sm:$0xf]
    %v246 = vld [vmem:[%s5 + $0x24] sm:$0xf]
    %v247 = vld [vmem:[%s5 + $0x28] sm:$0xf]
    %v248 = vld [vmem:[%s5 + $0x2c] sm:$0xf]
    %v249 = vld [vmem:[%s5 + $0x30] sm:$0xf]
    %v250 = vld [vmem:[%s5 + $0x34] sm:$0xf]
    %v251 = vld [vmem:[%s5 + $0x38] sm:$0xf]
    %v252 = vld [vmem:[%s5 + $0x3c] sm:$0xf]
    %v253 = vld [vmem:[%s6] sm:$0x1]
    %v255 = vlaneseq
    %v256 = vshrl.u32 %v255, 7
    %v257 = vsub.s32 0, %v256
    %v258 = vrot.slane %v253, %v257
    %v276 = vunpack.c.l.b16 %v237
    %v277 = vunpack.c.l.b16 %v238
    %v278 = vunpack.c.l.b16 %v239
    %v279 = vunpack.c.l.b16 %v240
    %v280 = vunpack.c.l.b16 %v241
    %v281 = vunpack.c.l.b16 %v242
    %v282 = vunpack.c.l.b16 %v243
    %v283 = vunpack.c.l.b16 %v244
    %v284 = vunpack.c.l.b16 %v245
    %v285 = vunpack.c.l.b16 %v246
    %v286 = vunpack.c.l.b16 %v247
    %v287 = vunpack.c.l.b16 %v248
    %v288 = vunpack.c.l.b16 %v249
    %v289 = vunpack.c.l.b16 %v250
    %v290 = vunpack.c.l.b16 %v251
    %v291 = vunpack.c.l.b16 %v252
    %v292 = vpack.c.b16 %v277, %v276
    %v293 = vpack.c.b16 %v279, %v278
    %v294 = vpack.c.b16 %v281, %v280
    %v295 = vpack.c.b16 %v283, %v282
    %v296 = vpack.c.b16 %v285, %v284
    %v297 = vpack.c.b16 %v287, %v286
    %v298 = vpack.c.b16 %v289, %v288
    %v299 = vpack.c.b16 %v291, %v290
    %308 = vmatprep.subr.bf16.mxu0 0
    %309 = vmatpush1.bf16.msra.mxu0 %v299
    %310 = vmatprep.subr.bf16.mxu0 0
    %311 = vmatpush1.bf16.msra.mxu0 %v298
    %312 = vmatprep.subr.bf16.mxu0 0
    %313 = vmatpush1.bf16.msra.mxu0 %v297
    %314 = vmatprep.subr.bf16.mxu0 0
    %315 = vmatpush1.bf16.msra.mxu0 %v296
    %316 = vmatprep.subr.bf16.mxu0 0
    %317 = vmatpush1.bf16.msra.mxu0 %v295
    %318 = vmatprep.subr.bf16.mxu0 0
    %319 = vmatpush1.bf16.msra.mxu0 %v294
    %320 = vmatprep.subr.bf16.mxu0 0
    %321 = vmatpush1.bf16.msra.mxu0 %v293
    %322 = vmatprep.subr.bf16.mxu0 0
    %323 = vmatpush1.bf16.msra.mxu0 %v292
    %324 = vmatprep.subr.bf16.mxu0 0
    %325 = vmatpush2.bf16.msra.mxu0 0
    %326 = vmatprep.subr.bf16.mxu0 0
    %327 = vmatpush2.bf16.msra.mxu0 0
    %328 = vmatprep.subr.bf16.mxu0 0
    %329 = vmatpush2.bf16.msra.mxu0 0
    %330 = vmatprep.subr.bf16.mxu0 0
    %331 = vmatpush2.bf16.msra.mxu0 0
    %332 = vmatprep.subr.bf16.mxu0 0
    %333 = vmatpush2.bf16.msra.mxu0 0
    %334 = vmatprep.subr.bf16.mxu0 0
    %335 = vmatpush2.bf16.msra.mxu0 0
    %336 = vmatprep.subr.bf16.mxu0 0
    %337 = vmatpush2.bf16.msra.mxu0 0
    %338 = vmatprep.subr.bf16.mxu0 0
    %339 = vmatpush2.bf16.msra.mxu0 0
    %340 = vmatprep.mubr.bf16.mxu0 0
    %341 = vmatmul.mubr.bf16.gmra.mxu0 %v236
    %v342 = vpop.f32.mrf.mxu0
    %v343 = vadd.f32 %v258, %v342
    %v344 = vpop.f32.mrf.mxu0
    %v345 = vpop.f32.mrf.mxu0
    %v346 = vadd.f32 %v258, %v345
    %v347 = vpop.f32.mrf.mxu0
    %348 = vdwg.mxu0
    %349 = vst [vmem:[#allocation2] sm:$0xff] %v343
    %350 = vst [vmem:[#allocation2 + $0x8] sm:$0xff] %v346
    // Predicated region
    $region30: #{simple_mlp_forward.1} parent=1 // pred_check
      _
    $region31: #{simple_mlp_forward.1} parent=1 // pred_check_branch
      %352 = sbr.rel (0) target = $region33
    $region32: #{simple_mlp_forward.1} parent=1 // pred_region
      %s354 = ssub.s32 256, 256
      %355 = vsyncadd [#allocation3], %s354
      %s356 = sshll.u32 [#allocation2], 4
      %s357 = int_to_ptr.vmem [resolvable:$true] %s356
      %362 = dma.vmem_to_hbm [thread:$0]  %s357, 256, %s7, [#allocation3], 128, 128, 8
    $region33: #{simple_mlp_forward.1} parent=1 // pred_fallthru
      _
    // Predicated region
    $region34: #{simple_mlp_forward.1} parent=1 // pred_check
      _
    $region35: #{simple_mlp_forward.1} parent=1 // pred_check_branch
      %364 = sbr.rel (0) target = $region37
    $region36: #{simple_mlp_forward.1} parent=1 // pred_region
      %365 = dma.done [#allocation3], 256
    $region37: #{simple_mlp_forward.1} parent=1 // pred_fallthru
      _
    %366 = vsyncpa [#allocation3], 1

</llo_original>
